<compile_context>
chip_gen: v7x
topology: tpu7x:2x2x1
jax: 0.10.0
libtpu: 0.0.40
codegen_flags: <defaults>
</compile_context>

<pallas_src>
import jax
import jax.numpy as jnp
from jax.experimental import pallas as pl
from jax.experimental.pallas import tpu as pltpu


_LANES = 1024                     # lane-dense column count (multiple of 128)
_TARGET_BLOCK_BYTES = 2 << 20     # ~2 MiB per buffer (v5e-safe, amortizes step cost)


def _round_up(n, m):
    return ((n + m - 1) // m) * m


def optaegd2_kernel(p_ref, x_ref, o_ref):
    # p_ref (SMEM): [alpha, afactor, mfactor, c1u, c2u, c1w, c2w]
    alpha = p_ref[0]
    afactor = p_ref[1]
    mfactor = p_ref[2]
    c1u = p_ref[3]
    c2u = p_ref[4]
    c1w = p_ref[5]
    c2w = p_ref[6]

    x = x_ref[...].astype(jnp.float32)     # stream native dtype, compute in f32
    d = jnp.tanh(alpha * x)

    # For scalar (dx, dy): flow(a, dx, dy) = a*C1 + C2 with
    #   C1 = 1 + dy + dy^2/2 ,  C2 = dx*(1 + 0.25*dy)   (precomputed in wrapper)
    u = d * c1u + c2u          # == flow(d, ux, uy); reference's v is identical to u
    w = d * c1w + c2w          # == flow(d, wx, wy)

    # sigmoid(t) == 0.5*tanh(0.5*t) + 0.5 : keeps everything on the tanh EUP
    # path -> exactly 4 transcendentals per element.
    sig_u = 0.5 * jnp.tanh(0.5 * u) + 0.5   # sigmoid(v) == sigmoid(u): computed once
    sig_w = 0.5 * jnp.tanh(0.5 * w) + 0.5
    dx = afactor * u * sig_u
    dy = mfactor * jnp.tanh(d) * sig_w

    # final flow(d, dx, dy) with tensor-valued dx, dy
    out = d * (1.0 + dy + dy * dy * 0.5) + dx + 0.25 * dx * dy
    o_ref[...] = out.astype(o_ref.dtype)
    # TODO(synk): on v6e/v7x a bf16 EUP path for the tanh chain is ~2x faster
    # but costs ~3 decimal digits; gate on model tolerance before enabling.


def optaegd2_forward(x, params):
    """Elementwise OptAEGD2 forward.

    x: any-shape float tensor (e.g. NCHW (B, C, H, W)); f32 or bf16.
    params: (9,) = [alpha, ux, uy, vx, vy, wx, wy, afactor, mfactor]
            (vx, vy are unused, matching the PyTorch reference).
    """
    shape = x.shape
    n = x.size
    itemsize = jnp.dtype(x.dtype).itemsize

    alpha, ux, uy, vx, vy, wx, wy, afactor, mfactor = (params[i] for i in range(9))
    del vx, vy  # unused in the reference module (v duplicates u)
    c1u = 1.0 + uy + uy * uy * 0.5
    c2u = ux * (1.0 + 0.25 * uy)
    c1w = 1.0 + wy + wy * wy * 0.5
    c2w = wx * (1.0 + 0.25 * wy)
    p = jnp.stack([alpha, afactor, mfactor, c1u, c2u, c1w, c2w]).astype(jnp.float32)

    # Lane/sublane-dense slab: pad the flat length only up to the next multiple
    # of 8 rows x 1024 lanes (NOT up to block_rows) so the reshape is legal.
    cols = _LANES
    rows = pl.cdiv(n, cols)
    padded_rows = _round_up(rows, 8)
    padded_n = padded_rows * cols

    xf = x.reshape(-1)
    if padded_n != n:
        xf = jnp.pad(xf, (0, padded_n - n))  # zeros are safe for tanh/sigmoid
    x2 = xf.reshape(padded_rows, cols)

    # ~2 MiB blocks; shrink for small inputs; guarantee >=2 blocks when the
    # slab is big enough so both v7x TensorCores get work.
    block_rows = _TARGET_BLOCK_BYTES // (cols * itemsize)
    block_rows = max(8, min(_round_up(block_rows, 8), padded_rows))
    if padded_rows >= 16 and pl.cdiv(padded_rows, block_rows) < 2:
        block_rows = _round_up(pl.cdiv(padded_rows, 2), 8)

    grid = (pl.cdiv(padded_rows, block_rows),)  # ragged last block is masked by Pallas

    out2 = pl.pallas_call(
        optaegd2_kernel,
        out_shape=jax.ShapeDtypeStruct((padded_rows, cols), x.dtype),
        grid=grid,
        in_specs=[
            pl.BlockSpec(memory_space=pltpu.MemorySpace.SMEM),       # scalar params
            pl.BlockSpec((block_rows, cols), lambda i: (i, 0)),      # data tile
        ],
        out_specs=pl.BlockSpec((block_rows, cols), lambda i: (i, 0)),
        compiler_params=pltpu.CompilerParams(
            dimension_semantics=("parallel",),                       # shard over v7x TCs
            vmem_limit_bytes=32 << 20,
        ),
        cost_estimate=pl.CostEstimate(
            flops=24 * padded_n,
            transcendentals=4 * padded_n,
            bytes_accessed=2 * padded_n * itemsize,
        ),
    )(p, x2)

    out_flat = out2.reshape(-1)
    if padded_n != n:
        out_flat = out_flat[:n]
    return out_flat.reshape(shape)


def make_params():
    # Deterministic init matching OptAEGD2.__init__:
    # alpha=1, ux=0, uy=1, vx=0, vy=1, wx=0, wy=1, afactor=0, mfactor=1
    return jnp.array([1.0, 0.0, 1.0, 0.0, 1.0, 0.0, 1.0, 0.0, 1.0],
                     dtype=jnp.float32)


def _reference(x, params):
    """Pure-JAX transcription of the PyTorch forward (note: v uses ux, uy)."""
    alpha, ux, uy, vx, vy, wx, wy, afactor, mfactor = (params[i] for i in range(9))

    def flow(a, dx, dy):
        return a * (1.0 + dy + dy * dy / 2.0) + dx + 0.25 * dx * dy

    shape = x.shape
    d = x.reshape(shape[0], -1)
    d = jnp.tanh(alpha * d)
    u = flow(d, ux, uy)
    v = flow(d, ux, uy)   # PyTorch module also uses ux, uy here; vx/vy are dead
    w = flow(d, wx, wy)
    dx = afactor * u * jax.nn.sigmoid(v)
    dy = mfactor * jnp.tanh(d) * jax.nn.sigmoid(w)
    return flow(d, dx, dy).reshape(shape)


if __name__ == "__main__":
    key = jax.random.PRNGKey(0)
    kx, kp = jax.random.split(key)
    x = jax.random.normal(kx, (2, 4, 16, 16), dtype=jnp.float32)  # NCHW

    params_init = make_params()
    # Perturbed params so every term (afactor, wx, ...) is exercised non-trivially.
    params_rand = params_init + 0.1 * jax.random.normal(kp, (9,), dtype=jnp.float32)

    for params in (params_init, params_rand):
        out = jax.block_until_ready(optaegd2_forward(x, params))
        ref = _reference(x, params)
        assert out.shape == x.shape and out.dtype == x.dtype
        assert jnp.allclose(out, ref, atol=1e-5, rtol=1e-5), "mismatch vs reference (f32)"

    # bf16 I/O path (half the HBM traffic); compare against an f32 reference
    # computed from the same bf16-quantized input.
    x_bf16 = x.astype(jnp.bfloat16)
    out_bf16 = jax.block_until_ready(optaegd2_forward(x_bf16, params_rand))
    ref_bf16 = _reference(x_bf16.astype(jnp.float32), params_rand)
    assert out_bf16.shape == x.shape and out_bf16.dtype == jnp.bfloat16
    assert jnp.allclose(out_bf16.astype(jnp.float32), ref_bf16, atol=2e-2, rtol=2e-2), \
        "mismatch vs reference (bf16)"

    print("KERNEL_OK")
</pallas_src>

<mosaic_0001>
module attributes {stable_mosaic.version = 11 : i64} {
  func.func @optaegd2_kernel(%arg0: i32, %arg1: memref<7xf32, #tpu.memory_space<smem>>, %arg2: memref<8x1024xf32, #tpu.memory_space<vmem>>, %arg3: memref<8x1024xf32, #tpu.memory_space<vmem>>) attributes {dimension_semantics = [#tpu.dimension_semantics<parallel>], iteration_bounds = array<i64: 1>, scalar_prefetch = 0 : i64, scratch_operands = 0 : i64, tpu.core_type = #tpu.core_type<tc>, window_params = [{transform_indices = @transform_0, window_bounds = array<i64: 7>}, {transform_indices = @transform_1, window_bounds = array<i64: 8, 1024>}, {transform_indices = @transform_2, window_bounds = array<i64: 8, 1024>}]} {
    %c0 = arith.constant 0 : index
    %0 = memref.load %arg1[%c0] : memref<7xf32, #tpu.memory_space<smem>>
    %c1 = arith.constant 1 : index
    %1 = memref.load %arg1[%c1] : memref<7xf32, #tpu.memory_space<smem>>
    %c2 = arith.constant 2 : index
    %2 = memref.load %arg1[%c2] : memref<7xf32, #tpu.memory_space<smem>>
    %c3 = arith.constant 3 : index
    %3 = memref.load %arg1[%c3] : memref<7xf32, #tpu.memory_space<smem>>
    %c4 = arith.constant 4 : index
    %4 = memref.load %arg1[%c4] : memref<7xf32, #tpu.memory_space<smem>>
    %c5 = arith.constant 5 : index
    %5 = memref.load %arg1[%c5] : memref<7xf32, #tpu.memory_space<smem>>
    %c6 = arith.constant 6 : index
    %6 = memref.load %arg1[%c6] : memref<7xf32, #tpu.memory_space<smem>>
    %c0_0 = arith.constant 0 : index
    %c0_1 = arith.constant 0 : index
    %7 = vector.load %arg2[%c0_0, %c0_1] : memref<8x1024xf32, #tpu.memory_space<vmem>>, vector<8x1024xf32>
    %8 = vector.broadcast %0 : f32 to vector<8x1024xf32>
    %9 = arith.mulf %8, %7 : vector<8x1024xf32>
    %10 = math.tanh %9 : vector<8x1024xf32>
    %11 = vector.broadcast %3 : f32 to vector<8x1024xf32>
    %12 = arith.mulf %10, %11 : vector<8x1024xf32>
    %13 = vector.broadcast %4 : f32 to vector<8x1024xf32>
    %14 = arith.addf %12, %13 : vector<8x1024xf32>
    %15 = vector.broadcast %5 : f32 to vector<8x1024xf32>
    %16 = arith.mulf %10, %15 : vector<8x1024xf32>
    %17 = vector.broadcast %6 : f32 to vector<8x1024xf32>
    %18 = arith.addf %16, %17 : vector<8x1024xf32>
    %cst = arith.constant 5.000000e-01 : f32
    %19 = vector.broadcast %cst : f32 to vector<8x1024xf32>
    %20 = arith.mulf %19, %14 : vector<8x1024xf32>
    %21 = math.tanh %20 : vector<8x1024xf32>
    %cst_2 = arith.constant 5.000000e-01 : f32
    %22 = vector.broadcast %cst_2 : f32 to vector<8x1024xf32>
    %23 = arith.mulf %22, %21 : vector<8x1024xf32>
    %cst_3 = arith.constant 5.000000e-01 : f32
    %24 = vector.broadcast %cst_3 : f32 to vector<8x1024xf32>
    %25 = arith.addf %23, %24 : vector<8x1024xf32>
    %cst_4 = arith.constant 5.000000e-01 : f32
    %26 = vector.broadcast %cst_4 : f32 to vector<8x1024xf32>
    %27 = arith.mulf %26, %18 : vector<8x1024xf32>
    %28 = math.tanh %27 : vector<8x1024xf32>
    %cst_5 = arith.constant 5.000000e-01 : f32
    %29 = vector.broadcast %cst_5 : f32 to vector<8x1024xf32>
    %30 = arith.mulf %29, %28 : vector<8x1024xf32>
    %cst_6 = arith.constant 5.000000e-01 : f32
    %31 = vector.broadcast %cst_6 : f32 to vector<8x1024xf32>
    %32 = arith.addf %30, %31 : vector<8x1024xf32>
    %33 = vector.broadcast %1 : f32 to vector<8x1024xf32>
    %34 = arith.mulf %33, %14 : vector<8x1024xf32>
    %35 = arith.mulf %34, %25 : vector<8x1024xf32>
    %36 = math.tanh %10 : vector<8x1024xf32>
    %37 = vector.broadcast %2 : f32 to vector<8x1024xf32>
    %38 = arith.mulf %37, %36 : vector<8x1024xf32>
    %39 = arith.mulf %38, %32 : vector<8x1024xf32>
    %cst_7 = arith.constant 1.000000e+00 : f32
    %40 = vector.broadcast %cst_7 : f32 to vector<8x1024xf32>
    %41 = arith.addf %40, %39 : vector<8x1024xf32>
    %42 = arith.mulf %39, %39 : vector<8x1024xf32>
    %cst_8 = arith.constant 5.000000e-01 : f32
    %43 = vector.broadcast %cst_8 : f32 to vector<8x1024xf32>
    %44 = arith.mulf %42, %43 : vector<8x1024xf32>
    %45 = arith.addf %41, %44 : vector<8x1024xf32>
    %46 = arith.mulf %10, %45 : vector<8x1024xf32>
    %47 = arith.addf %46, %35 : vector<8x1024xf32>
    %cst_9 = arith.constant 2.500000e-01 : f32
    %48 = vector.broadcast %cst_9 : f32 to vector<8x1024xf32>
    %49 = arith.mulf %48, %35 : vector<8x1024xf32>
    %50 = arith.mulf %49, %39 : vector<8x1024xf32>
    %51 = arith.addf %47, %50 : vector<8x1024xf32>
    %c0_10 = arith.constant 0 : index
    %c0_11 = arith.constant 0 : index
    %52 = vector.load %arg3[%c0_10, %c0_11] : memref<8x1024xf32, #tpu.memory_space<vmem>>, vector<8x1024xf32>
    tpu.vector_store %arg3[%c0_10, %c0_11], %51 {strides = array<i32>} : memref<8x1024xf32, #tpu.memory_space<vmem>>, vector<8x1024xf32>,
    return
  }
  func.func @transform_0(%arg0: i32) -> i32 {
    %c0_i32 = arith.constant 0 : i32
    %c0_i32_0 = arith.constant 0 : i32
    return %c0_i32 : i32
  }
  func.func @transform_1(%arg0: i32) -> (i32, i32) {
    %c0_i32 = arith.constant 0 : i32
    %c0_i32_0 = arith.constant 0 : i32
    return %arg0, %c0_i32 : i32, i32
  }
  func.func @transform_2(%arg0: i32) -> (i32, i32) {
    %c0_i32 = arith.constant 0 : i32
    %c0_i32_0 = arith.constant 0 : i32
    return %arg0, %c0_i32 : i32, i32
  }
}

</mosaic_0001>

<llo_original>
// kernel: tpu_custom_call.1
$region0: #{tpu_custom_call.1}
  #allocation0 [shape = 'u32[]', space=smem, size = 0x4, offset = 0x4, fixed_abs, tag = 'smem constant byte address 0x4 - core index']
  #allocation1 [shape = 'u32[144,128]{1,0:T(1,128)}', space=vmem, size = 0x12000, scoped, tag = 'internal scratch']
  %s0 = inlined_call_operand.hbm [shape: f32[7], index: 0, kind: input, shape index: {}]
  %s1 = inlined_call_operand.hbm [shape: f32[8,1024], index: 1, kind: input, shape index: {}]
  %s2 = inlined_call_operand.hbm [shape: f32[8,1024], index: 2, kind: output, shape index: {}]
  %s3 = sld [smem:[#allocation0]]
  $region26: #{tpu_custom_call.1} parent=0
    _
  %s5 = ssub.s32 1, %s3
  %s6 = scalar_select 0, %s5, %s3
  $region1: #{tpu_custom_call.1} parent=0
    #allocation2 [shape = 'u8[512]{0}', space=smem, size = 0x200, scoped, tag = 'input window, operand 0, single buffered']
    #allocation3 [shape = 's32[1]{0}', space=sflag, size = 0x4, scoped, tag = 'scoped memory for tpu_custom_call.1']
    #allocation4 [shape = 's32[1]{0}', space=sflag, size = 0x4, scoped, tag = 'scoped memory for tpu_custom_call.1']
    #allocation5 [shape = 's32[1]{0}', space=sflag, size = 0x4, scoped, tag = 'scoped memory for tpu_custom_call.1']
    #allocation6 [shape = 'u8[32768]{0}', space=vmem, size = 0x8000, scoped, tag = 'input window, operand 1, single buffered']
    #allocation7 [shape = 'u8[32768]{0}', space=vmem, size = 0x8000, scoped, tag = 'output window, operand 0, single buffered']
    %7 = vsyncpa [#allocation5], 0
    %8 = vsyncpa [#allocation3], 0
    %9 = vsyncpa [#allocation4], 0
    // Predicated region
    $region2: #{tpu_custom_call.1} parent=1 // pred_check
      _
    $region3: #{tpu_custom_call.1} parent=1 // pred_check_branch
      %11 = sbr.rel (0) target = $region5
    $region4: #{tpu_custom_call.1} parent=1 // pred_region
      %s13 = ssub.s32 16, 16
      %14 = vsyncadd [#allocation5], %s13
      %17 = dma.hbm_to_smem %s0, 16, [#allocation2], [#allocation5]
    $region5: #{tpu_custom_call.1} parent=1 // pred_fallthru
      _
    // Predicated region
    $region6: #{tpu_custom_call.1} parent=1 // pred_check
      _
    $region7: #{tpu_custom_call.1} parent=1 // pred_check_branch
      %19 = sbr.rel (0) target = $region9
    $region8: #{tpu_custom_call.1} parent=1 // pred_region
      %s21 = ssub.s32 1024, 1024
      %22 = vsyncadd [#allocation3], %s21
      %s24 = sshll.u32 [#allocation6], 4
      %s25 = int_to_ptr.vmem [resolvable:$true] %s24
      %27 = dma.hbm_to_vmem [thread:$0]  %s1, 1024, %s25, [#allocation3]
    $region9: #{tpu_custom_call.1} parent=1 // pred_fallthru
      _
    // Predicated region
    $region10: #{tpu_custom_call.1} parent=1 // pred_check
      _
    $region11: #{tpu_custom_call.1} parent=1 // pred_check_branch
      %29 = sbr.rel (0) target = $region13
    $region12: #{tpu_custom_call.1} parent=1 // pred_region
      %30 = dma.done [#allocation5], 16
    $region13: #{tpu_custom_call.1} parent=1 // pred_fallthru
      _
    // Predicated region
    $region14: #{tpu_custom_call.1} parent=1 // pred_check
      _
    $region15: #{tpu_custom_call.1} parent=1 // pred_check_branch
      %32 = sbr.rel (0) target = $region17
    $region16: #{tpu_custom_call.1} parent=1 // pred_region
      %33 = dma.done [#allocation3], 1024
    $region17: #{tpu_custom_call.1} parent=1 // pred_fallthru
      _
    %34 = sfence
    %s35 = sld [smem:[#allocation2]]
    %s36 = sld [smem:[#allocation2 + $0x1]]
    %s37 = sld [smem:[#allocation2 + $0x2]]
    %s38 = sld [smem:[#allocation2 + $0x3]]
    %s39 = sld [smem:[#allocation2 + $0x4]]
    %s40 = sld [smem:[#allocation2 + $0x5]]
    %s41 = sld [smem:[#allocation2 + $0x6]]
    %v42 = vld [vmem:[#allocation6] sm:$0xff]
    %v43 = vld [vmem:[#allocation6 + $0x8] sm:$0xff]
    %v44 = vld [vmem:[#allocation6 + $0x10] sm:$0xff]
    %v45 = vld [vmem:[#allocation6 + $0x18] sm:$0xff]
    %v46 = vld [vmem:[#allocation6 + $0x20] sm:$0xff]
    %v47 = vld [vmem:[#allocation6 + $0x28] sm:$0xff]
    %v48 = vld [vmem:[#allocation6 + $0x30] sm:$0xff]
    %v49 = vld [vmem:[#allocation6 + $0x38] sm:$0xff]
    %v50 = vstv %s35
    %v51 = vmul.f32 %v50, %v42
    %v52 = vmul.f32 %v50, %v43
    %v53 = vmul.f32 %v50, %v44
    %v54 = vmul.f32 %v50, %v45
    %v55 = vmul.f32 %v50, %v46
    %v56 = vmul.f32 %v50, %v47
    %v57 = vmul.f32 %v50, %v48
    %v58 = vmul.f32 %v50, %v49
    %v59 = vtanh.pop %v51
    %v60 = vtanh.pop %v52
    %v61 = vtanh.pop %v53
    %v62 = vtanh.pop %v54
    %v63 = vtanh.pop %v55
    %v64 = vtanh.pop %v56
    %v65 = vtanh.pop %v57
    %v66 = vtanh.pop %v58
    %v67 = vstv %s38
    %v68 = vmul.f32 %v59, %v67
    %v69 = vmul.f32 %v60, %v67
    %v70 = vmul.f32 %v61, %v67
    %v71 = vmul.f32 %v62, %v67
    %v72 = vmul.f32 %v63, %v67
    %v73 = vmul.f32 %v64, %v67
    %v74 = vmul.f32 %v65, %v67
    %v75 = vmul.f32 %v66, %v67
    %v76 = vstv %s39
    %v77 = vadd.f32 %v68, %v76
    %v78 = vadd.f32 %v69, %v76
    %v79 = vadd.f32 %v70, %v76
    %v80 = vadd.f32 %v71, %v76
    %v81 = vadd.f32 %v72, %v76
    %v82 = vadd.f32 %v73, %v76
    %v83 = vadd.f32 %v74, %v76
    %v84 = vadd.f32 %v75, %v76
    %v85 = vstv %s40
    %v86 = vmul.f32 %v59, %v85
    %v87 = vmul.f32 %v60, %v85
    %v88 = vmul.f32 %v61, %v85
    %v89 = vmul.f32 %v62, %v85
    %v90 = vmul.f32 %v63, %v85
    %v91 = vmul.f32 %v64, %v85
    %v92 = vmul.f32 %v65, %v85
    %v93 = vmul.f32 %v66, %v85
    %v94 = vstv %s41
    %v95 = vadd.f32 %v86, %v94
    %v96 = vadd.f32 %v87, %v94
    %v97 = vadd.f32 %v88, %v94
    %v98 = vadd.f32 %v89, %v94
    %v99 = vadd.f32 %v90, %v94
    %v100 = vadd.f32 %v91, %v94
    %v101 = vadd.f32 %v92, %v94
    %v102 = vadd.f32 %v93, %v94
    %v103 = vmul.f32 %v77, 0.5
    %v104 = vmul.f32 %v78, 0.5
    %v105 = vmul.f32 %v79, 0.5
    %v106 = vmul.f32 %v80, 0.5
    %v107 = vmul.f32 %v81, 0.5
    %v108 = vmul.f32 %v82, 0.5
    %v109 = vmul.f32 %v83, 0.5
    %v110 = vmul.f32 %v84, 0.5
    %v111 = vtanh.pop %v103
    %v112 = vtanh.pop %v104
    %v113 = vtanh.pop %v105
    %v114 = vtanh.pop %v106
    %v115 = vtanh.pop %v107
    %v116 = vtanh.pop %v108
    %v117 = vtanh.pop %v109
    %v118 = vtanh.pop %v110
    %v119 = vmul.f32 %v111, 0.5
    %v120 = vmul.f32 %v112, 0.5
    %v121 = vmul.f32 %v113, 0.5
    %v122 = vmul.f32 %v114, 0.5
    %v123 = vmul.f32 %v115, 0.5
    %v124 = vmul.f32 %v116, 0.5
    %v125 = vmul.f32 %v117, 0.5
    %v126 = vmul.f32 %v118, 0.5
    %v127 = vadd.f32 %v119, 0.5
    %v128 = vadd.f32 %v120, 0.5
    %v129 = vadd.f32 %v121, 0.5
    %v130 = vadd.f32 %v122, 0.5
    %v131 = vadd.f32 %v123, 0.5
    %v132 = vadd.f32 %v124, 0.5
    %v133 = vadd.f32 %v125, 0.5
    %v134 = vadd.f32 %v126, 0.5
    %v135 = vmul.f32 %v95, 0.5
    %v136 = vmul.f32 %v96, 0.5
    %v137 = vmul.f32 %v97, 0.5
    %v138 = vmul.f32 %v98, 0.5
    %v139 = vmul.f32 %v99, 0.5
    %v140 = vmul.f32 %v100, 0.5
    %v141 = vmul.f32 %v101, 0.5
    %v142 = vmul.f32 %v102, 0.5
    %v143 = vtanh.pop %v135
    %v144 = vtanh.pop %v136
    %v145 = vtanh.pop %v137
    %v146 = vtanh.pop %v138
    %v147 = vtanh.pop %v139
    %v148 = vtanh.pop %v140
    %v149 = vtanh.pop %v141
    %v150 = vtanh.pop %v142
    %v151 = vmul.f32 %v143, 0.5
    %v152 = vmul.f32 %v144, 0.5
    %v153 = vmul.f32 %v145, 0.5
    %v154 = vmul.f32 %v146, 0.5
    %v155 = vmul.f32 %v147, 0.5
    %v156 = vmul.f32 %v148, 0.5
    %v157 = vmul.f32 %v149, 0.5
    %v158 = vmul.f32 %v150, 0.5
    %v159 = vadd.f32 %v151, 0.5
    %v160 = vadd.f32 %v152, 0.5
    %v161 = vadd.f32 %v153, 0.5
    %v162 = vadd.f32 %v154, 0.5
    %v163 = vadd.f32 %v155, 0.5
    %v164 = vadd.f32 %v156, 0.5
    %v165 = vadd.f32 %v157, 0.5
    %v166 = vadd.f32 %v158, 0.5
    %v167 = vstv %s36
    %v168 = vmul.f32 %v167, %v77
    %v169 = vmul.f32 %v167, %v78
    %v170 = vmul.f32 %v167, %v79
    %v171 = vmul.f32 %v167, %v80
    %v172 = vmul.f32 %v167, %v81
    %v173 = vmul.f32 %v167, %v82
    %v174 = vmul.f32 %v167, %v83
    %v175 = vmul.f32 %v167, %v84
    %v176 = vmul.f32 %v168, %v127
    %v177 = vmul.f32 %v169, %v128
    %v178 = vmul.f32 %v170, %v129
    %v179 = vmul.f32 %v171, %v130
    %v180 = vmul.f32 %v172, %v131
    %v181 = vmul.f32 %v173, %v132
    %v182 = vmul.f32 %v174, %v133
    %v183 = vmul.f32 %v175, %v134
    %v184 = vtanh.pop %v59
    %v185 = vtanh.pop %v60
    %v186 = vtanh.pop %v61
    %v187 = vtanh.pop %v62
    %v188 = vtanh.pop %v63
    %v189 = vtanh.pop %v64
    %v190 = vtanh.pop %v65
    %v191 = vtanh.pop %v66
    %v192 = vstv %s37
    %v193 = vmul.f32 %v192, %v184
    %v194 = vmul.f32 %v192, %v185
    %v195 = vmul.f32 %v192, %v186
    %v196 = vmul.f32 %v192, %v187
    %v197 = vmul.f32 %v192, %v188
    %v198 = vmul.f32 %v192, %v189
    %v199 = vmul.f32 %v192, %v190
    %v200 = vmul.f32 %v192, %v191
    %v201 = vmul.f32 %v193, %v159
    %v202 = vmul.f32 %v194, %v160
    %v203 = vmul.f32 %v195, %v161
    %v204 = vmul.f32 %v196, %v162
    %v205 = vmul.f32 %v197, %v163
    %v206 = vmul.f32 %v198, %v164
    %v207 = vmul.f32 %v199, %v165
    %v208 = vmul.f32 %v200, %v166
    %v209 = vadd.f32 %v201, 1.0
    %v210 = vadd.f32 %v202, 1.0
    %v211 = vadd.f32 %v203, 1.0
    %v212 = vadd.f32 %v204, 1.0
    %v213 = vadd.f32 %v205, 1.0
    %v214 = vadd.f32 %v206, 1.0
    %v215 = vadd.f32 %v207, 1.0
    %v216 = vadd.f32 %v208, 1.0
    %v217 = vmul.f32 %v201, %v201
    %v218 = vmul.f32 %v202, %v202
    %v219 = vmul.f32 %v203, %v203
    %v220 = vmul.f32 %v204, %v204
    %v221 = vmul.f32 %v205, %v205
    %v222 = vmul.f32 %v206, %v206
    %v223 = vmul.f32 %v207, %v207
    %v224 = vmul.f32 %v208, %v208
    %v225 = vmul.f32 %v217, 0.5
    %v226 = vmul.f32 %v218, 0.5
    %v227 = vmul.f32 %v219, 0.5
    %v228 = vmul.f32 %v220, 0.5
    %v229 = vmul.f32 %v221, 0.5
    %v230 = vmul.f32 %v222, 0.5
    %v231 = vmul.f32 %v223, 0.5
    %v232 = vmul.f32 %v224, 0.5
    %v233 = vadd.f32 %v209, %v225
    %v234 = vadd.f32 %v210, %v226
    %v235 = vadd.f32 %v211, %v227
    %v236 = vadd.f32 %v212, %v228
    %v237 = vadd.f32 %v213, %v229
    %v238 = vadd.f32 %v214, %v230
    %v239 = vadd.f32 %v215, %v231
    %v240 = vadd.f32 %v216, %v232
    %v241 = vmul.f32 %v59, %v233
    %v242 = vmul.f32 %v60, %v234
    %v243 = vmul.f32 %v61, %v235
    %v244 = vmul.f32 %v62, %v236
    %v245 = vmul.f32 %v63, %v237
    %v246 = vmul.f32 %v64, %v238
    %v247 = vmul.f32 %v65, %v239
    %v248 = vmul.f32 %v66, %v240
    %v249 = vadd.f32 %v241, %v176
    %v250 = vadd.f32 %v242, %v177
    %v251 = vadd.f32 %v243, %v178
    %v252 = vadd.f32 %v244, %v179
    %v253 = vadd.f32 %v245, %v180
    %v254 = vadd.f32 %v246, %v181
    %v255 = vadd.f32 %v247, %v182
    %v256 = vadd.f32 %v248, %v183
    %v257 = vmul.f32 %v176, 0.25
    %v258 = vmul.f32 %v177, 0.25
    %v259 = vmul.f32 %v178, 0.25
    %v260 = vmul.f32 %v179, 0.25
    %v261 = vmul.f32 %v180, 0.25
    %v262 = vmul.f32 %v181, 0.25
    %v263 = vmul.f32 %v182, 0.25
    %v264 = vmul.f32 %v183, 0.25
    %v265 = vmul.f32 %v257, %v201
    %v266 = vmul.f32 %v258, %v202
    %v267 = vmul.f32 %v259, %v203
    %v268 = vmul.f32 %v260, %v204
    %v269 = vmul.f32 %v261, %v205
    %v270 = vmul.f32 %v262, %v206
    %v271 = vmul.f32 %v263, %v207
    %v272 = vmul.f32 %v264, %v208
    %v273 = vadd.f32 %v249, %v265
    %v274 = vadd.f32 %v250, %v266
    %v275 = vadd.f32 %v251, %v267
    %v276 = vadd.f32 %v252, %v268
    %v277 = vadd.f32 %v253, %v269
    %v278 = vadd.f32 %v254, %v270
    %v279 = vadd.f32 %v255, %v271
    %v280 = vadd.f32 %v256, %v272
    %281 = vst [vmem:[#allocation7] sm:$0xff] %v273
    %282 = vst [vmem:[#allocation7 + $0x8] sm:$0xff] %v274
    %283 = vst [vmem:[#allocation7 + $0x10] sm:$0xff] %v275
    %284 = vst [vmem:[#allocation7 + $0x18] sm:$0xff] %v276
    %285 = vst [vmem:[#allocation7 + $0x20] sm:$0xff] %v277
    %286 = vst [vmem:[#allocation7 + $0x28] sm:$0xff] %v278
    %287 = vst [vmem:[#allocation7 + $0x30] sm:$0xff] %v279
    %288 = vst [vmem:[#allocation7 + $0x38] sm:$0xff] %v280
    // Predicated region
    $region18: #{tpu_custom_call.1} parent=1 // pred_check
      _
    $region19: #{tpu_custom_call.1} parent=1 // pred_check_branch
      %290 = sbr.rel (0) target = $region21
    $region20: #{tpu_custom_call.1} parent=1 // pred_region
      %s292 = ssub.s32 1024, 1024
      %293 = vsyncadd [#allocation4], %s292
      %s295 = sshll.u32 [#allocation7], 4
      %s296 = int_to_ptr.vmem [resolvable:$true] %s295
      %298 = dma.vmem_to_hbm [thread:$0]  %s296, 1024, %s2, [#allocation4]
    $region21: #{tpu_custom_call.1} parent=1 // pred_fallthru
      _
    // Predicated region
    $region22: #{tpu_custom_call.1} parent=1 // pred_check
      _
    $region23: #{tpu_custom_call.1} parent=1 // pred_check_branch
      %300 = sbr.rel (0) target = $region25
    $region24: #{tpu_custom_call.1} parent=1 // pred_region
      %301 = dma.done [#allocation4], 1024
    $region25: #{tpu_custom_call.1} parent=1 // pred_fallthru
      _
    %302 = vsyncpa [#allocation3], 1
    %303 = vsyncpa [#allocation4], 1
    %304 = vsyncpa [#allocation5], 1

</llo_original>
